<compile_context>
chip_gen: v6e
topology: v6e:2x2x1
jax: 0.10.0
libtpu: 0.0.40
codegen_flags: <defaults>
</compile_context>

<pallas_src>
import jax
import jax.numpy as jnp
import numpy as np
from jax import lax
from jax.experimental import pallas as pl
from jax.experimental.pallas import tpu as pltpu

# Small, module-consistent shapes: batch=2, seq=8, vocab=32, embed=32.
B, S, V, E = 2, 8, 32, 32
BS = B * S  # 16 rows processed in one kernel invocation


def transformer_kernel(ids_ref, tw_ref, b_ref, out_ref):
    # Fused nn.Embedding + encoder-linear: one-hot select of the pre-projected
    # table rows on the MXU, then bias + ReLU on the VPU.
    ids = ids_ref[...]                                               # (BS, 1) int32
    onehot = (ids == lax.broadcasted_iota(jnp.int32, (BS, V), 1))    # (BS, V) bool
    onehot = onehot.astype(jnp.bfloat16)                             # 0/1 exact in bf16
    enc = jnp.dot(onehot, tw_ref[...],
                  preferred_element_type=jnp.float32) + b_ref[...]   # (BS, E) f32
    out_ref[...] = jnp.maximum(enc, 0.0)


def prepare_params(table, w_enc, b_enc):
    """One-time parameter prep (NOT in the per-call path).

    Fuses the embedding table with the encoder weight:
        table_w[v] = table[v] @ W   (bf16 operands, f32 accumulate, stored bf16)
    so the kernel only needs one matmul per call.
    """
    table_w = jnp.dot(table.astype(jnp.bfloat16), w_enc.astype(jnp.bfloat16),
                      preferred_element_type=jnp.float32).astype(jnp.bfloat16)
    return table_w, b_enc.astype(jnp.float32)


@jax.jit
def transformer_forward(texts, table_w, bias):
    # Flatten tokens to one (BS, 1) int32 column vector (single kernel step).
    ids = texts.reshape(BS, 1).astype(jnp.int32)

    flops = 2 * BS * V * E + 2 * BS * E                 # matmul + bias + relu
    bytes_accessed = (BS * 4                            # ids
                      + V * E * 2                       # fused table (bf16)
                      + E * 4                           # bias
                      + BS * E * 4)                     # output

    enc = pl.pallas_call(
        transformer_kernel,
        out_shape=jax.ShapeDtypeStruct((BS, E), jnp.float32),
        in_specs=[
            pl.BlockSpec(memory_space=pltpu.MemorySpace.VMEM),  # token ids   (BS, 1)
            pl.BlockSpec(memory_space=pltpu.MemorySpace.VMEM),  # fused table (V, E) bf16
            pl.BlockSpec(memory_space=pltpu.MemorySpace.VMEM),  # enc bias    (1, E) f32
        ],
        out_specs=pl.BlockSpec(memory_space=pltpu.MemorySpace.VMEM),
        cost_estimate=pl.CostEstimate(flops=flops, transcendentals=0,
                                      bytes_accessed=bytes_accessed),
    )(ids, table_w, bias)

    # Restore [B, S, E].
    return enc.reshape(B, S, E)


if __name__ == "__main__":
    key = jax.random.PRNGKey(0)
    k1, k2, k3, k4 = jax.random.split(key, 4)

    # Deterministic synthetic parameters (nn.Embedding default init ~ N(0, 1)).
    texts = jax.random.randint(k1, (B, S), 0, V, dtype=jnp.int32)
    table = jax.random.normal(k2, (V, E), dtype=jnp.float32)
    w_enc = jax.random.normal(k3, (E, E), dtype=jnp.float32) / np.sqrt(E)
    b_enc = jax.random.normal(k4, (1, E), dtype=jnp.float32) * 0.01

    # One-time param prep (hoisted out of the per-call path).
    table_w, bias = prepare_params(table, w_enc, b_enc)
    table_w, bias = jax.block_until_ready((table_w, bias))

    enc = transformer_forward(texts, table_w, bias)
    jax.block_until_ready(enc)

    # Pure-JAX reference: standard gather -> bf16 linear (f32 acc) -> bias -> ReLU.
    ref_emb = jnp.take(table, texts.reshape(BS), axis=0)                     # (BS, E)
    ref_enc = jnp.maximum(
        jnp.dot(ref_emb.astype(jnp.bfloat16), w_enc.astype(jnp.bfloat16),
                preferred_element_type=jnp.float32) + b_enc,
        0.0).reshape(B, S, E)

    assert np.allclose(np.asarray(enc), np.asarray(ref_enc), atol=2e-2, rtol=2e-2)

    print("KERNEL_OK")
</pallas_src>

<mosaic_0001>
module attributes {stable_mosaic.version = 11 : i64} {
  func.func @transformer_kernel(%arg0: memref<16x1xi32, #tpu.memory_space<vmem>>, %arg1: memref<32x32xbf16, #tpu.memory_space<vmem>>, %arg2: memref<1x32xf32, #tpu.memory_space<vmem>>, %arg3: memref<16x32xf32, #tpu.memory_space<vmem>>) attributes {dimension_semantics = [], scalar_prefetch = 0 : i64, scratch_operands = 0 : i64, tpu.core_type = #tpu.core_type<tc>} {
    %c0 = arith.constant 0 : index
    %c0_0 = arith.constant 0 : index
    %0 = vector.load %arg0[%c0, %c0_0] : memref<16x1xi32, #tpu.memory_space<vmem>>, vector<16x1xi32>
    %1 = tpu.iota {dimensions = array<i32: 1>} : vector<16x32xi32>
    %2 = vector.broadcast %0 : vector<16x1xi32> to vector<16x32xi32>
    %3 = arith.cmpi eq, %2, %1 : vector<16x32xi32>
    %4 = arith.extui %3 : vector<16x32xi1> to vector<16x32xi32>
    %5 = arith.sitofp %4 : vector<16x32xi32> to vector<16x32xf32>
    %6 = arith.truncf %5 : vector<16x32xf32> to vector<16x32xbf16>
    %c0_1 = arith.constant 0 : index
    %c0_2 = arith.constant 0 : index
    %7 = vector.load %arg1[%c0_1, %c0_2] : memref<32x32xbf16, #tpu.memory_space<vmem>>, vector<32x32xbf16>
    %cst = arith.constant dense<0.000000e+00> : vector<16x32xf32>
    %8 = tpu.matmul %6, %7, %cst {dimension_numbers = #tpu.dot_dimension_numbers<[1], [0], [0], [1], [0, 0, 1, 1], [], []>} : vector<16x32xbf16>, vector<32x32xbf16>, vector<16x32xf32> -> vector<16x32xf32>
    %c0_3 = arith.constant 0 : index
    %c0_4 = arith.constant 0 : index
    %9 = vector.load %arg2[%c0_3, %c0_4] : memref<1x32xf32, #tpu.memory_space<vmem>>, vector<1x32xf32>
    %10 = vector.broadcast %9 : vector<1x32xf32> to vector<16x32xf32>
    %11 = arith.addf %8, %10 : vector<16x32xf32>
    %cst_5 = arith.constant 0.000000e+00 : f32
    %12 = vector.broadcast %cst_5 : f32 to vector<16x32xf32>
    %13 = arith.maximumf %11, %12 : vector<16x32xf32>
    %c0_6 = arith.constant 0 : index
    %c0_7 = arith.constant 0 : index
    %14 = vector.load %arg3[%c0_6, %c0_7] : memref<16x32xf32, #tpu.memory_space<vmem>>, vector<16x32xf32>
    tpu.vector_store %arg3[%c0_6, %c0_7], %13 {strides = array<i32>} : memref<16x32xf32, #tpu.memory_space<vmem>>, vector<16x32xf32>,
    return
  }
}

</mosaic_0001>

<llo_original>
// kernel: transformer_forward.1
$region0: #{transformer_forward.1}
  #allocation0 [shape = 'u32[]', space=smem, size = 0x4, offset = 0x4, fixed_abs, tag = 'smem constant byte address 0x4 - core index']
  #allocation1 [shape = 'u32[144,128]{1,0:T(1,128)}', space=vmem, size = 0x12000, scoped, tag = 'internal scratch']
  %s0 = inlined_call_operand.vmem [shape: s32[16,1], index: 0, kind: input, shape index: {}]
  %s1 = inlined_call_operand.vmem [shape: bf16[32,32], index: 1, kind: input, shape index: {}]
  %s2 = inlined_call_operand.vmem [shape: f32[1,32], index: 2, kind: input, shape index: {}]
  %s3 = inlined_call_operand.hbm [shape: f32[16,32], index: 3, kind: output, shape index: {}]
  %s4 = sld [smem:[#allocation0]]
  $region22: #{transformer_forward.1} parent=0
    _
  %s6 = ssub.s32 1, %s4
  %s7 = scalar_select 0, %s6, %s4
  $region1: #{transformer_forward.1} parent=0
    #allocation2 [shape = 'u8[8192]{0}', space=vmem, size = 0x2000, scoped, tag = 'output window, operand 0, single buffered']
    #allocation3 [shape = 's32[1]{0}', space=sflag, size = 0x4, scoped, tag = 'scoped memory for transformer_forward.1']
    %8 = vsyncpa [#allocation3], 0
    // Predicated region
    $region2: #{transformer_forward.1} parent=1 // pred_check
      _
    $region3: #{transformer_forward.1} parent=1 // pred_check_branch
      %10 = sbr.rel (0) target = $region5
    $region4: #{transformer_forward.1} parent=1 // pred_region
      _
    $region5: #{transformer_forward.1} parent=1 // pred_fallthru
      _
    // Predicated region
    $region6: #{transformer_forward.1} parent=1 // pred_check
      _
    $region7: #{transformer_forward.1} parent=1 // pred_check_branch
      %12 = sbr.rel (0) target = $region9
    $region8: #{transformer_forward.1} parent=1 // pred_region
      _
    $region9: #{transformer_forward.1} parent=1 // pred_fallthru
      _
    // Predicated region
    $region10: #{transformer_forward.1} parent=1 // pred_check
      _
    $region11: #{transformer_forward.1} parent=1 // pred_check_branch
      %14 = sbr.rel (0) target = $region13
    $region12: #{transformer_forward.1} parent=1 // pred_region
      _
    $region13: #{transformer_forward.1} parent=1 // pred_fallthru
      _
    %v16 = vld [vmem:[%s0] sm:$0xff]
    %v17 = vld [vmem:[%s0 + $0x8] sm:$0xff]
    %v18 = vlaneseq
    %v19 = vand.u32 %v18, 127
    %20 = vset.pattern.permute.xlu0 0
    %21 = vperm.xlu0 %20, %v16
    %v22 = vpop.permute.xlu0 %21
    %23 = vset.pattern.permute.xlu0 0
    %24 = vperm.xlu0 %23, %v17
    %v25 = vpop.permute.xlu0 %24
    %vm26 = vcmp.eq.s32.totalorder %v22, %v19
    %vm27 = vcmp.eq.s32.totalorder %v25, %v19
    %v28 = vsel %vm26, 1, 0
    %v29 = vsel %vm27, 1, 0
    %v30 = vcvt.s32.f32 %v28
    %v31 = vcvt.s32.f32 %v29
    %v32 = vpack.c.bf16 %v31, %v30
    %v33 = vld [vmem:[%s1] sm:$0xf]
    %v34 = vld [vmem:[%s1 + $0x4] sm:$0xf]
    %v35 = vld [vmem:[%s1 + $0x8] sm:$0xf]
    %v36 = vld [vmem:[%s1 + $0xc] sm:$0xf]
    %v37 = vld [vmem:[%s2] sm:$0x1]
    %v39 = vlaneseq
    %v40 = vshrl.u32 %v39, 7
    %v41 = vsub.s32 0, %v40
    %v42 = vrot.slane %v37, %v41
    %v48 = vunpack.c.l.b16 %v33
    %v49 = vunpack.c.l.b16 %v34
    %v50 = vunpack.c.l.b16 %v35
    %v51 = vunpack.c.l.b16 %v36
    %v52 = vpack.c.b16 %v49, %v48
    %v53 = vpack.c.b16 %v51, %v50
    %vm56 = vcmask 261120
    %v58 = vsel %vm56, %v32, 0
    %60 = vmatprep.subr.bf16.mxu0 0
    %61 = vmatpush1.bf16.msra.mxu0 0
    %62 = vmatprep.subr.bf16.mxu0 0
    %63 = vmatpush1.bf16.msra.mxu0 0
    %64 = vmatprep.subr.bf16.mxu0 0
    %65 = vmatpush1.bf16.msra.mxu0 0
    %66 = vmatprep.subr.bf16.mxu0 0
    %67 = vmatpush1.bf16.msra.mxu0 0
    %68 = vmatprep.subr.bf16.mxu0 0
    %69 = vmatpush1.bf16.msra.mxu0 0
    %70 = vmatprep.subr.bf16.mxu0 0
    %71 = vmatpush1.bf16.msra.mxu0 0
    %72 = vmatprep.subr.bf16.mxu0 0
    %73 = vmatpush1.bf16.msra.mxu0 %v53
    %74 = vmatprep.subr.bf16.mxu0 0
    %75 = vmatpush1.bf16.msra.mxu0 %v52
    %76 = vmatprep.subr.bf16.mxu0 0
    %77 = vmatpush2.bf16.msra.mxu0 0
    %78 = vmatprep.subr.bf16.mxu0 0
    %79 = vmatpush2.bf16.msra.mxu0 0
    %80 = vmatprep.subr.bf16.mxu0 0
    %81 = vmatpush2.bf16.msra.mxu0 0
    %82 = vmatprep.subr.bf16.mxu0 0
    %83 = vmatpush2.bf16.msra.mxu0 0
    %84 = vmatprep.subr.bf16.mxu0 0
    %85 = vmatpush2.bf16.msra.mxu0 0
    %86 = vmatprep.subr.bf16.mxu0 0
    %87 = vmatpush2.bf16.msra.mxu0 0
    %88 = vmatprep.subr.bf16.mxu0 0
    %89 = vmatpush2.bf16.msra.mxu0 0
    %90 = vmatprep.subr.bf16.mxu0 0
    %91 = vmatpush2.bf16.msra.mxu0 0
    %92 = vmatprep.mubr.bf16.mxu0 0
    %93 = vmatmul.mubr.bf16.gmra.mxu0 %v58
    %v94 = vpop.f32.mrf.mxu0
    %v95 = vadd.f32 %v42, %v94
    %v96 = vpop.f32.mrf.mxu0
    %v97 = vpop.f32.mrf.mxu0
    %v98 = vadd.f32 %v42, %v97
    %v99 = vpop.f32.mrf.mxu0
    %100 = vdwg.mxu0
    %v101 = vmax.f32 %v95, 0.0
    %v102 = vmax.f32 %v98, 0.0
    %103 = vst.msk [vmem:[#allocation2] sm:$0xff] %vm56, %v101
    %104 = vst.msk [vmem:[#allocation2 + $0x8] sm:$0xff] %vm56, %v102
    // Predicated region
    $region14: #{transformer_forward.1} parent=1 // pred_check
      _
    $region15: #{transformer_forward.1} parent=1 // pred_check_branch
      %106 = sbr.rel (0) target = $region17
    $region16: #{transformer_forward.1} parent=1 // pred_region
      %s108 = ssub.s32 256, 256
      %109 = vsyncadd [#allocation3], %s108
      %s110 = sshll.u32 [#allocation2], 4
      %s111 = int_to_ptr.vmem [resolvable:$true] %s110
      %116 = dma.vmem_to_hbm [thread:$0]  %s111, 256, %s3, [#allocation3], 128, 128, 8
    $region17: #{transformer_forward.1} parent=1 // pred_fallthru
      _
    // Predicated region
    $region18: #{transformer_forward.1} parent=1 // pred_check
      _
    $region19: #{transformer_forward.1} parent=1 // pred_check_branch
      %118 = sbr.rel (0) target = $region21
    $region20: #{transformer_forward.1} parent=1 // pred_region
      %119 = dma.done [#allocation3], 256
    $region21: #{transformer_forward.1} parent=1 // pred_fallthru
      _
    %120 = vsyncpa [#allocation3], 1

</llo_original>
